<compile_context>
chip_gen: v7x
topology: tpu7x:2x2x1
jax: 0.10.0
libtpu: 0.0.40
codegen_flags: <defaults>
</compile_context>

<pallas_src>
import jax
import jax.numpy as jnp
from jax.experimental import pallas as pl
from jax.experimental.pallas import tpu as pltpu


def _identity_copy_kernel(x_ref, y_ref):
    # Pure tile copy: best case for an identity (DMA + vld/vst only).
    y_ref[...] = x_ref[...]


def _pick_lane_cols(total):
    """Largest lane-dense column count (multiple of 128) dividing `total`."""
    for cols in (2048, 1024, 512, 256, 128):
        if total % cols == 0:
            return cols
    return None


def _pick_row_tile(rows, cols, itemsize, max_tile_bytes=2 * 1024 * 1024):
    """Row tile: whole axis if it fits, else a multiple-of-8 tile <= ~2 MiB."""
    max_rows = max(8, max_tile_bytes // max(1, cols * itemsize))
    if rows <= max_rows:
        return rows                       # full-dim block (always legal)
    return max(8, (max_rows // 8) * 8)    # (8,128)-aligned tile


def _identity_copy(x):
    """Identity via a lane-dense, gridded, input-aliased Pallas copy."""
    orig_shape = x.shape
    total = x.size
    itemsize = jnp.dtype(x.dtype).itemsize

    cols = _pick_lane_cols(total)
    if cols is None:
        rows, cols = 1, total             # odd/tiny sizes: one whole-array block
    else:
        rows = total // cols
    flat = x.reshape(rows, cols)

    row_tile = _pick_row_tile(rows, cols, itemsize)
    grid = (pl.cdiv(rows, row_tile),)

    y_flat = pl.pallas_call(
        _identity_copy_kernel,
        out_shape=jax.ShapeDtypeStruct((rows, cols), x.dtype),
        grid=grid,
        in_specs=[pl.BlockSpec((row_tile, cols), lambda i: (i, 0))],
        out_specs=pl.BlockSpec((row_tile, cols), lambda i: (i, 0)),
        # Output buffer aliases the input buffer: no extra HBM round-trip is
        # generated inside the call for this identity.
        input_output_aliases={0: 0},
        compiler_params=pltpu.CompilerParams(
            dimension_semantics=("parallel",),
            vmem_limit_bytes=32 * 1024 * 1024,
        ),
    )(flat)
    return y_flat.reshape(orig_shape)


def identity2d(x, return_indices=True):
    """Pallas implementation of Identity2d.forward.

    Args:
      x: jnp array of shape (N, C, H, W) (any dtype).
      return_indices: mirrors the module flag.

    Returns:
      (x, indices) with indices int32 of shape (N,) if return_indices,
      else just x.
    """
    y = _identity_copy(x)
    if return_indices:
        # Trivial XLA iota in the wrapper — no kernel cost, no masked stores.
        indices = jnp.arange(x.shape[0], dtype=jnp.int32)
        return y, indices
    return y


if __name__ == "__main__":
    key = jax.random.PRNGKey(0)
    x = jax.random.normal(key, (2, 4, 16, 16), dtype=jnp.float32)

    # return_indices=True path
    y, indices = identity2d(x, return_indices=True)
    jax.block_until_ready((y, indices))

    # return_indices=False path
    y_only = identity2d(x, return_indices=False)
    jax.block_until_ready(y_only)

    # Correctness checks against the reference semantics.
    assert y.shape == x.shape and y.dtype == x.dtype
    assert bool(jnp.all(y == x))
    assert indices.shape == (x.shape[0],)
    assert bool(jnp.all(indices == jnp.arange(x.shape[0], dtype=jnp.int32)))
    assert bool(jnp.all(y_only == x))

    print("KERNEL_OK")
</pallas_src>

<mosaic_0001>
module attributes {stable_mosaic.version = 11 : i64} {
  func.func @_identity_copy_kernel(%arg0: i32, %arg1: memref<1x2048xf32, #tpu.memory_space<vmem>>, %arg2: memref<1x2048xf32, #tpu.memory_space<vmem>>) attributes {dimension_semantics = [#tpu.dimension_semantics<parallel>], iteration_bounds = array<i64: 1>, scalar_prefetch = 0 : i64, scratch_operands = 0 : i64, tpu.core_type = #tpu.core_type<tc>, window_params = [{transform_indices = @transform_0, window_bounds = array<i64: 1, 2048>}, {transform_indices = @transform_1, window_bounds = array<i64: 1, 2048>}]} {
    %c0 = arith.constant 0 : index
    %c0_0 = arith.constant 0 : index
    %0 = vector.load %arg1[%c0, %c0_0] : memref<1x2048xf32, #tpu.memory_space<vmem>>, vector<1x2048xf32>
    %c0_1 = arith.constant 0 : index
    %c0_2 = arith.constant 0 : index
    %1 = vector.load %arg2[%c0_1, %c0_2] : memref<1x2048xf32, #tpu.memory_space<vmem>>, vector<1x2048xf32>
    tpu.vector_store %arg2[%c0_1, %c0_2], %0 {strides = array<i32>} : memref<1x2048xf32, #tpu.memory_space<vmem>>, vector<1x2048xf32>,
    return
  }
  func.func @transform_0(%arg0: i32) -> (i32, i32) {
    %c0_i32 = arith.constant 0 : i32
    %c0_i32_0 = arith.constant 0 : i32
    return %arg0, %c0_i32 : i32, i32
  }
  func.func @transform_1(%arg0: i32) -> (i32, i32) {
    %c0_i32 = arith.constant 0 : i32
    %c0_i32_0 = arith.constant 0 : i32
    return %arg0, %c0_i32 : i32, i32
  }
}

</mosaic_0001>

<llo_original>
// kernel: tpu_custom_call.1
$region0: #{tpu_custom_call.1}
  #allocation0 [shape = 'u32[]', space=smem, size = 0x4, offset = 0x4, fixed_abs, tag = 'smem constant byte address 0x4 - core index']
  #allocation1 [shape = 'u32[144,128]{1,0:T(1,128)}', space=vmem, size = 0x12000, scoped, tag = 'internal scratch']
  %s0 = inlined_call_operand.hbm [shape: f32[1,2048], index: 0, kind: input, shape index: {}, may-alias: {0,1}]
  %s1 = inlined_call_operand.hbm [shape: f32[1,2048], index: 1, kind: output, shape index: {}, may-alias: {0,1}]
  %s2 = sld [smem:[#allocation0]]
  $region18: #{tpu_custom_call.1} parent=0
    _
  %s4 = ssub.s32 1, %s2
  %s5 = scalar_select 0, %s4, %s2
  $region1: #{tpu_custom_call.1} parent=0
    #allocation2 [shape = 'u8[8192]{0}', space=vmem, size = 0x2000, scoped, tag = 'input window, operand 0, single buffered']
    #allocation3 [shape = 's32[1]{0}', space=sflag, size = 0x4, scoped, tag = 'scoped memory for tpu_custom_call.1']
    #allocation4 [shape = 's32[1]{0}', space=sflag, size = 0x4, scoped, tag = 'scoped memory for tpu_custom_call.1']
    #allocation5 [shape = 'u8[8192]{0}', space=vmem, size = 0x2000, scoped, tag = 'output window, operand 0, single buffered']
    %6 = vsyncpa [#allocation3], 0
    %7 = vsyncpa [#allocation4], 0
    // Predicated region
    $region2: #{tpu_custom_call.1} parent=1 // pred_check
      _
    $region3: #{tpu_custom_call.1} parent=1 // pred_check_branch
      %9 = sbr.rel (0) target = $region5
    $region4: #{tpu_custom_call.1} parent=1 // pred_region
      %s11 = ssub.s32 256, 256
      %12 = vsyncadd [#allocation3], %s11
      %s14 = sshll.u32 [#allocation2], 4
      %s15 = int_to_ptr.vmem [resolvable:$true] %s14
      %17 = dma.hbm_to_vmem [thread:$0]  %s0, 256, %s15, [#allocation3]
    $region5: #{tpu_custom_call.1} parent=1 // pred_fallthru
      _
    // Predicated region
    $region6: #{tpu_custom_call.1} parent=1 // pred_check
      _
    $region7: #{tpu_custom_call.1} parent=1 // pred_check_branch
      %19 = sbr.rel (0) target = $region9
    $region8: #{tpu_custom_call.1} parent=1 // pred_region
      %20 = dma.done [#allocation3], 256
    $region9: #{tpu_custom_call.1} parent=1 // pred_fallthru
      _
    %v21 = vld [vmem:[#allocation2] sm:$0xff]
    %v22 = vld [vmem:[#allocation2 + $0x8] sm:$0xff]
    %23 = vst [vmem:[#allocation5] sm:$0xff] %v21
    %24 = vst [vmem:[#allocation5 + $0x8] sm:$0xff] %v22
    // Predicated region
    $region10: #{tpu_custom_call.1} parent=1 // pred_check
      _
    $region11: #{tpu_custom_call.1} parent=1 // pred_check_branch
      %26 = sbr.rel (0) target = $region13
    $region12: #{tpu_custom_call.1} parent=1 // pred_region
      %s28 = ssub.s32 256, 256
      %29 = vsyncadd [#allocation4], %s28
      %s31 = sshll.u32 [#allocation5], 4
      %s32 = int_to_ptr.vmem [resolvable:$true] %s31
      %34 = dma.vmem_to_hbm [thread:$0]  %s32, 256, %s1, [#allocation4]
    $region13: #{tpu_custom_call.1} parent=1 // pred_fallthru
      _
    // Predicated region
    $region14: #{tpu_custom_call.1} parent=1 // pred_check
      _
    $region15: #{tpu_custom_call.1} parent=1 // pred_check_branch
      %36 = sbr.rel (0) target = $region17
    $region16: #{tpu_custom_call.1} parent=1 // pred_region
      %37 = dma.done [#allocation4], 256
    $region17: #{tpu_custom_call.1} parent=1 // pred_fallthru
      _
    %38 = vsyncpa [#allocation3], 1
    %39 = vsyncpa [#allocation4], 1

</llo_original>
